<compile_context>
chip_gen: v5e
topology: v5e:2x2
jax: 0.10.0
libtpu: 0.0.40
codegen_flags: <defaults>
</compile_context>

<pallas_src>
import functools

import jax
import jax.numpy as jnp
from jax.experimental import pallas as pl
from jax.experimental.pallas import tpu as pltpu

LN_EPS = 1e-5


# ---------------------------------------------------------------------------
# Kernel 1: token + segment embedding (in-kernel one-hot -> MXU) + LayerNorm([L, E])
# ---------------------------------------------------------------------------
def token_ln_kernel(tok_ids_ref, seg_ids_ref, tok_tbl_ref, seg_tbl_ref,
                    gamma_ref, beta_ref, o_ref):
    # tok_ids_ref/seg_ids_ref: (1, L, 1) int32
    # tok_tbl_ref: (V, E)  seg_tbl_ref: (3, E)  gamma/beta: (L, E)  o_ref: (1, L, E)
    V = tok_tbl_ref.shape[0]
    S = seg_tbl_ref.shape[0]
    L = gamma_ref.shape[0]

    tok_ids = tok_ids_ref[0]                                   # (L, 1) int32
    seg_ids = seg_ids_ref[0]                                   # (L, 1) int32

    # One-hot built on the VPU (no (B,L,V) HBM traffic), then MXU lookup-matmul.
    tok_oh = (jax.lax.broadcasted_iota(jnp.int32, (L, V), 1) == tok_ids
              ).astype(jnp.float32)                            # (L, V)
    seg_oh = (jax.lax.broadcasted_iota(jnp.int32, (L, S), 1) == seg_ids
              ).astype(jnp.float32)                            # (L, 3)

    x = jnp.dot(tok_oh, tok_tbl_ref[...], preferred_element_type=jnp.float32)
    x = x + jnp.dot(seg_oh, seg_tbl_ref[...], preferred_element_type=jnp.float32)

    # torch LayerNorm([seq_len, embed_size]): normalize over the whole (L, E) slab.
    mean = jnp.mean(x)
    var = jnp.mean(jnp.square(x - mean))
    y = (x - mean) * jax.lax.rsqrt(var + LN_EPS) * gamma_ref[...] + beta_ref[...]
    o_ref[0] = y.astype(o_ref.dtype)


# ---------------------------------------------------------------------------
# Kernel 2: POV relative bias, TI query residues per program, lane-dense output
# ---------------------------------------------------------------------------
def pov_bias_kernel(feats_ref, m_ref, bias_ref, gamma_ref, beta_ref, o_ref,
                    *, ti, n_heads):
    # feats_ref: (1, L, 12)  = [c_j | vec(R_j)] for every key residue j   (i-invariant, resident)
    # m_ref:     (1, 1, 12, TI*H)   folded per-query weights, column t*H+h
    # bias_ref:  (1, 1, 1, TI*H)    per-query bias (c_i @ R_i @ Wd)
    # gamma/beta:(L, TI*H)          LayerNorm affine tiled across the TI queries
    # o_ref:     (1, 1, L, TI*H)    lane-dense output block
    TI = ti
    H = n_heads
    L = feats_ref.shape[1]

    feats = feats_ref[0]                                        # (L, 12)
    M = m_ref[0, 0]                                             # (12, TI*H)
    b_row = bias_ref[0, 0]                                      # (1, TI*H)

    # One MXU matmul for all TI queries: e[j, t*H+h] = feats[j] . M[:, t*H+h] - bias[t,h]
    e = jnp.dot(feats, M, preferred_element_type=jnp.float32) - b_row   # (L, TI*H)

    # --- LayerNorm([L_key, H]) per query t ---------------------------------
    # Group selectors (columns t*H .. t*H+H-1 belong to query t) built from 2-D iota,
    # so no lane-splitting reshape/transpose is needed inside the kernel.
    r = jax.lax.broadcasted_iota(jnp.int32, (TI * H, TI), 0)
    g = jax.lax.broadcasted_iota(jnp.int32, (TI * H, TI), 1) * H
    sel = jnp.logical_and(r >= g, r < g + H).astype(jnp.float32)        # (TI*H, TI)
    gt = jax.lax.broadcasted_iota(jnp.int32, (TI, TI * H), 0) * H
    ct = jax.lax.broadcasted_iota(jnp.int32, (TI, TI * H), 1)
    selT = jnp.logical_and(ct >= gt, ct < gt + H).astype(jnp.float32)   # (TI, TI*H)

    inv_n = 1.0 / float(L * H)
    colsum = jnp.sum(e, axis=0, keepdims=True)                          # (1, TI*H)
    mean_g = jnp.dot(colsum, sel, preferred_element_type=jnp.float32) * inv_n   # (1, TI)
    mean_c = jnp.dot(mean_g, selT, preferred_element_type=jnp.float32)          # (1, TI*H)
    centered = e - mean_c
    sqsum = jnp.sum(centered * centered, axis=0, keepdims=True)         # (1, TI*H)
    var_g = jnp.dot(sqsum, sel, preferred_element_type=jnp.float32) * inv_n     # (1, TI)
    inv_g = jax.lax.rsqrt(var_g + LN_EPS)
    inv_c = jnp.dot(inv_g, selT, preferred_element_type=jnp.float32)            # (1, TI*H)

    y = centered * inv_c * gamma_ref[...] + beta_ref[...]
    o_ref[0, 0] = y.astype(o_ref.dtype)


# ---------------------------------------------------------------------------
# Glue
# ---------------------------------------------------------------------------
def quat_to_rotmat(q):
    q = q / jnp.linalg.norm(q, axis=-1, keepdims=True)
    w, x, y, z = q[..., 0], q[..., 1], q[..., 2], q[..., 3]
    rows = jnp.stack([
        1 - 2 * (y * y + z * z), 2 * (x * y - z * w),     2 * (x * z + y * w),
        2 * (x * y + z * w),     1 - 2 * (x * x + z * z), 2 * (y * z - x * w),
        2 * (x * z - y * w),     2 * (y * z + x * w),     1 - 2 * (x * x + y * y),
    ], axis=-1)
    return rows.reshape(q.shape[:-1] + (3, 3))


def _choose_ti(L, H, max_lanes=2048, max_block_bytes=2 * 1024 * 1024):
    """Largest divisor TI of L with a lane-dense but VMEM-safe (L, TI*H) f32 block."""
    ti = 1
    for cand in range(1, L + 1):
        if L % cand != 0:
            continue
        if cand * H > max_lanes:
            continue
        if L * cand * H * 4 > max_block_bytes:   # output block bytes (v7x-safe)
            continue
        ti = cand
    return ti


def petri_pov_embedding(params, seqs, coords, rots_q, segment_label):
    B, L = seqs.shape
    V, E = params["tok_table"].shape
    H = params["W"].shape[0]

    # ---- token / segment path (int ids in, one-hot built in-kernel) ----
    x = pl.pallas_call(
        token_ln_kernel,
        out_shape=jax.ShapeDtypeStruct((B, L, E), jnp.float32),
        grid=(B,),
        in_specs=[
            pl.BlockSpec((1, L, 1), lambda b: (b, 0, 0)),
            pl.BlockSpec((1, L, 1), lambda b: (b, 0, 0)),
            pl.BlockSpec((V, E), lambda b: (0, 0)),
            pl.BlockSpec((3, E), lambda b: (0, 0)),
            pl.BlockSpec((L, E), lambda b: (0, 0)),
            pl.BlockSpec((L, E), lambda b: (0, 0)),
        ],
        out_specs=pl.BlockSpec((1, L, E), lambda b: (b, 0, 0)),
        compiler_params=pltpu.CompilerParams(dimension_semantics=("parallel",)),
    )(seqs.reshape(B, L, 1).astype(jnp.int32),
      segment_label.reshape(B, L, 1).astype(jnp.int32),
      params["tok_table"], params["seg_table"],
      params["gamma"], params["beta"])

    # ---- POV relative-bias path ----
    R = quat_to_rotmat(rots_q).astype(jnp.float32)                 # (B, L, 3, 3)
    Rflat = R.reshape(B, L, 9)                                     # vec(R_j), index 3m+l
    c32 = coords.astype(jnp.float32)
    feats = jnp.concatenate([c32, Rflat], axis=-1)                 # (B, L, 12) key features

    # Fold the query-dependent rotation into the weights (removes the kron tensor):
    #   M_i = [ R_i @ Wd ; kron(R_i, I3) @ Wr ]   (12, H),  bias_i = c_i @ R_i @ Wd
    Wd = params["W"][:, :3].T                                      # (3, H)
    Wr3 = params["W"][:, 3:].T.reshape(3, 3, H)                    # (k, l, h)
    Md = jnp.einsum("bqmk,kh->bqmh", R, Wd)                        # (B, L, 3, H)
    Mr = jnp.einsum("bqmk,klh->bqmlh", R, Wr3)                     # (B, L, 3, 3, H)
    Mfold = jnp.concatenate([Md, Mr.reshape(B, L, 9, H)], axis=2)  # (B, L, 12, H)
    bias_q = jnp.einsum("bqm,bqmh->bqh", c32, Md)                  # (B, L, H)

    TI = _choose_ti(L, H)
    nI = L // TI
    # Lay the folded weights out as (12, TI*H) blocks (column index = t*H + h).
    M_blk = (Mfold.reshape(B, nI, TI, 12, H)
             .transpose(0, 1, 3, 2, 4).reshape(B, nI, 12, TI * H))
    bias_blk = bias_q.reshape(B, nI, 1, TI * H)
    gamma_t = jnp.tile(params["gamma_rel"], (1, TI))               # (L, TI*H)
    beta_t = jnp.tile(params["beta_rel"], (1, TI))                 # (L, TI*H)

    kern = functools.partial(pov_bias_kernel, ti=TI, n_heads=H)
    out = pl.pallas_call(
        kern,
        out_shape=jax.ShapeDtypeStruct((B, nI, L, TI * H), jnp.float32),
        grid=(B, nI),
        in_specs=[
            pl.BlockSpec((1, L, 12), lambda b, i: (b, 0, 0)),            # resident over i
            pl.BlockSpec((1, 1, 12, TI * H), lambda b, i: (b, i, 0, 0)),
            pl.BlockSpec((1, 1, 1, TI * H), lambda b, i: (b, i, 0, 0)),
            pl.BlockSpec((L, TI * H), lambda b, i: (0, 0)),
            pl.BlockSpec((L, TI * H), lambda b, i: (0, 0)),
        ],
        out_specs=pl.BlockSpec((1, 1, L, TI * H), lambda b, i: (b, i, 0, 0)),
        compiler_params=pltpu.CompilerParams(
            dimension_semantics=("parallel", "parallel"),
            vmem_limit_bytes=32 * 1024 * 1024),
    )(feats, M_blk, bias_blk, gamma_t, beta_t)

    # Layout plumbing back to (B, L_query, L_key, H) in the wrapper.
    relative_bias = (out.reshape(B, nI, L, TI, H)
                     .transpose(0, 1, 3, 2, 4).reshape(B, L, L, H))
    return x, relative_bias


# ---------------------------------------------------------------------------
# Pure-JAX reference (mirrors the PyTorch forward) for correctness checking
# ---------------------------------------------------------------------------
def reference_forward(params, seqs, coords, rots_q, segment_label):
    B, L = seqs.shape
    x = params["tok_table"][seqs] + params["seg_table"][segment_label]
    mean = x.mean(axis=(1, 2), keepdims=True)
    var = ((x - mean) ** 2).mean(axis=(1, 2), keepdims=True)
    x = (x - mean) * jax.lax.rsqrt(var + LN_EPS) * params["gamma"] + params["beta"]

    R = quat_to_rotmat(rots_q)
    Rinv = jnp.swapaxes(R, -1, -2)
    c = coords
    d = c[:, None, :, :] - c[:, :, None, :]                         # d[b,i,j] = c_j - c_i
    d = jnp.einsum("bikm,bijm->bijk", Rinv, d)
    Rprod = jnp.einsum("bikm,bjml->bijkl", Rinv, R)
    feats = jnp.concatenate([d, Rprod.reshape(B, L, L, 9)], axis=-1)
    e = jnp.einsum("bijf,hf->bijh", feats, params["W"])
    mean = e.mean(axis=(2, 3), keepdims=True)
    var = ((e - mean) ** 2).mean(axis=(2, 3), keepdims=True)
    e = (e - mean) * jax.lax.rsqrt(var + LN_EPS) * params["gamma_rel"] + params["beta_rel"]
    return x, e


# ---------------------------------------------------------------------------
if __name__ == "__main__":
    B, L, E, H, V = 2, 8, 32, 4, 24   # batch, seq_len, embed_size, n_heads, vocab_size

    key = jax.random.PRNGKey(0)
    k_tok, k_seg, k_w, k_seq, k_segl, k_c, k_q = jax.random.split(key, 7)

    tok_table = jax.random.normal(k_tok, (V, E), dtype=jnp.float32)
    tok_table = tok_table.at[2].set(0.0)            # padding_idx=2
    seg_table = jax.random.normal(k_seg, (3, E), dtype=jnp.float32)
    seg_table = seg_table.at[2].set(0.0)            # padding_idx=2
    W = jax.random.uniform(k_w, (H, 12), dtype=jnp.float32, minval=0.0, maxval=1.0)

    params = dict(
        tok_table=tok_table,
        seg_table=seg_table,
        W=W,
        gamma=jnp.ones((L, E), jnp.float32),      # nn.LayerNorm([seq_len, embed_size])
        beta=jnp.zeros((L, E), jnp.float32),
        gamma_rel=jnp.ones((L, H), jnp.float32),  # nn.LayerNorm([seq_len, n_heads])
        beta_rel=jnp.zeros((L, H), jnp.float32),
    )

    seqs = jax.random.randint(k_seq, (B, L), 0, V)
    segment_label = jax.random.randint(k_segl, (B, L), 0, 3)
    coords = jax.random.normal(k_c, (B, L, 3), dtype=jnp.float32)
    rots_q = jax.random.normal(k_q, (B, L, 4), dtype=jnp.float32)

    x, relative_bias = petri_pov_embedding(params, seqs, coords, rots_q, segment_label)
    x = jax.block_until_ready(x)
    relative_bias = jax.block_until_ready(relative_bias)

    x_ref, bias_ref = reference_forward(params, seqs, coords, rots_q, segment_label)
    assert x.shape == (B, L, E) and relative_bias.shape == (B, L, L, H)
    assert jnp.allclose(x, x_ref, atol=1e-3, rtol=1e-3), "token path mismatch"
    assert jnp.allclose(relative_bias, bias_ref, atol=1e-3, rtol=1e-3), "bias path mismatch"

    print("KERNEL_OK")
</pallas_src>

<mosaic_0001>
module attributes {stable_mosaic.version = 11 : i64} {
  func.func @token_ln_kernel(%arg0: i32, %arg1: memref<1x8x1xi32, #tpu.memory_space<vmem>>, %arg2: memref<1x8x1xi32, #tpu.memory_space<vmem>>, %arg3: memref<24x32xf32, #tpu.memory_space<vmem>>, %arg4: memref<3x32xf32, #tpu.memory_space<vmem>>, %arg5: memref<8x32xf32, #tpu.memory_space<vmem>>, %arg6: memref<8x32xf32, #tpu.memory_space<vmem>>, %arg7: memref<1x8x32xf32, #tpu.memory_space<vmem>>) attributes {dimension_semantics = [#tpu.dimension_semantics<parallel>], iteration_bounds = array<i64: 2>, scalar_prefetch = 0 : i64, scratch_operands = 0 : i64, tpu.core_type = #tpu.core_type<tc>, window_params = [{transform_indices = @transform_0, window_bounds = array<i64: 1, 8, 1>}, {transform_indices = @transform_1, window_bounds = array<i64: 1, 8, 1>}, {pipeline_mode = #tpu.pipeline_mode<synchronous>, transform_indices = @transform_2, window_bounds = array<i64: 24, 32>}, {pipeline_mode = #tpu.pipeline_mode<synchronous>, transform_indices = @transform_3, window_bounds = array<i64: 3, 32>}, {pipeline_mode = #tpu.pipeline_mode<synchronous>, transform_indices = @transform_4, window_bounds = array<i64: 8, 32>}, {pipeline_mode = #tpu.pipeline_mode<synchronous>, transform_indices = @transform_5, window_bounds = array<i64: 8, 32>}, {transform_indices = @transform_6, window_bounds = array<i64: 1, 8, 32>}]} {
    %c0 = arith.constant 0 : index
    %c0_0 = arith.constant 0 : index
    %c0_1 = arith.constant 0 : index
    %0 = vector.load %arg1[%c0, %c0_0, %c0_1] : memref<1x8x1xi32, #tpu.memory_space<vmem>>, vector<1x8x1xi32>
    %1 = vector.shape_cast %0 : vector<1x8x1xi32> to vector<8x1xi32>
    %c0_2 = arith.constant 0 : index
    %c0_3 = arith.constant 0 : index
    %c0_4 = arith.constant 0 : index
    %2 = vector.load %arg2[%c0_2, %c0_3, %c0_4] : memref<1x8x1xi32, #tpu.memory_space<vmem>>, vector<1x8x1xi32>
    %3 = vector.shape_cast %2 : vector<1x8x1xi32> to vector<8x1xi32>
    %4 = tpu.iota {dimensions = array<i32: 1>} : vector<8x24xi32>
    %5 = vector.broadcast %1 : vector<8x1xi32> to vector<8x24xi32>
    %6 = arith.cmpi eq, %4, %5 : vector<8x24xi32>
    %7 = arith.extui %6 : vector<8x24xi1> to vector<8x24xi32>
    %8 = arith.sitofp %7 : vector<8x24xi32> to vector<8x24xf32>
    %9 = tpu.iota {dimensions = array<i32: 1>} : vector<8x3xi32>
    %10 = vector.broadcast %3 : vector<8x1xi32> to vector<8x3xi32>
    %11 = arith.cmpi eq, %9, %10 : vector<8x3xi32>
    %12 = arith.extui %11 : vector<8x3xi1> to vector<8x3xi32>
    %13 = arith.sitofp %12 : vector<8x3xi32> to vector<8x3xf32>
    %c0_5 = arith.constant 0 : index
    %c0_6 = arith.constant 0 : index
    %14 = vector.load %arg3[%c0_5, %c0_6] : memref<24x32xf32, #tpu.memory_space<vmem>>, vector<24x32xf32>
    %cst = arith.constant dense<0.000000e+00> : vector<8x32xf32>
    %15 = tpu.matmul %8, %14, %cst {dimension_numbers = #tpu.dot_dimension_numbers<[1], [0], [0], [1], [0, 0, 1, 1], [], []>} : vector<8x24xf32>, vector<24x32xf32>, vector<8x32xf32> -> vector<8x32xf32>
    %c0_7 = arith.constant 0 : index
    %c0_8 = arith.constant 0 : index
    %16 = vector.load %arg4[%c0_7, %c0_8] : memref<3x32xf32, #tpu.memory_space<vmem>>, vector<3x32xf32>
    %cst_9 = arith.constant dense<0.000000e+00> : vector<8x32xf32>
    %17 = tpu.matmul %13, %16, %cst_9 {dimension_numbers = #tpu.dot_dimension_numbers<[1], [0], [0], [1], [0, 0, 1, 1], [], []>} : vector<8x3xf32>, vector<3x32xf32>, vector<8x32xf32> -> vector<8x32xf32>
    %18 = arith.addf %15, %17 : vector<8x32xf32>
    %19 = vector.shape_cast %18 : vector<8x32xf32> to vector<1x8x32xf32>
    %cst_10 = arith.constant dense<0.000000e+00> : vector<1xf32>
    %20 = vector.multi_reduction <add>, %19, %cst_10 [1, 2] : vector<1x8x32xf32> to vector<1xf32>
    %21 = vector.shape_cast %20 : vector<1xf32> to vector<1x1x1xf32>
    %22 = vector.extract %21[0, 0, 0] : f32 from vector<1x1x1xf32>
    %cst_11 = arith.constant 2.560000e+02 : f32
    %23 = arith.divf %22, %cst_11 : f32
    %24 = vector.broadcast %23 : f32 to vector<8x32xf32>
    %25 = arith.subf %18, %24 : vector<8x32xf32>
    %26 = arith.mulf %25, %25 : vector<8x32xf32>
    %27 = vector.shape_cast %26 : vector<8x32xf32> to vector<1x8x32xf32>
    %cst_12 = arith.constant dense<0.000000e+00> : vector<1xf32>
    %28 = vector.multi_reduction <add>, %27, %cst_12 [1, 2] : vector<1x8x32xf32> to vector<1xf32>
    %29 = vector.shape_cast %28 : vector<1xf32> to vector<1x1x1xf32>
    %30 = vector.extract %29[0, 0, 0] : f32 from vector<1x1x1xf32>
    %cst_13 = arith.constant 2.560000e+02 : f32
    %31 = arith.divf %30, %cst_13 : f32
    %32 = vector.broadcast %23 : f32 to vector<8x32xf32>
    %33 = arith.subf %18, %32 : vector<8x32xf32>
    %cst_14 = arith.constant 9.99999974E-6 : f32
    %34 = arith.addf %31, %cst_14 : f32
    %35 = math.rsqrt %34 : f32
    %36 = vector.broadcast %35 : f32 to vector<8x32xf32>
    %37 = arith.mulf %33, %36 : vector<8x32xf32>
    %c0_15 = arith.constant 0 : index
    %c0_16 = arith.constant 0 : index
    %38 = vector.load %arg5[%c0_15, %c0_16] : memref<8x32xf32, #tpu.memory_space<vmem>>, vector<8x32xf32>
    %39 = arith.mulf %37, %38 : vector<8x32xf32>
    %c0_17 = arith.constant 0 : index
    %c0_18 = arith.constant 0 : index
    %40 = vector.load %arg6[%c0_17, %c0_18] : memref<8x32xf32, #tpu.memory_space<vmem>>, vector<8x32xf32>
    %41 = arith.addf %39, %40 : vector<8x32xf32>
    %c0_19 = arith.constant 0 : index
    %c0_20 = arith.constant 0 : index
    %c0_21 = arith.constant 0 : index
    %42 = vector.load %arg7[%c0_19, %c0_20, %c0_21] : memref<1x8x32xf32, #tpu.memory_space<vmem>>, vector<1x8x32xf32>
    %43 = vector.shape_cast %42 : vector<1x8x32xf32> to vector<8x32xf32>
    %44 = vector.shape_cast %41 : vector<8x32xf32> to vector<1x8x32xf32>
    tpu.vector_store %arg7[%c0_19, %c0_20, %c0_21], %44 {strides = array<i32>} : memref<1x8x32xf32, #tpu.memory_space<vmem>>, vector<1x8x32xf32>,
    return
  }
  func.func @transform_0(%arg0: i32) -> (i32, i32, i32) {
    %c0_i32 = arith.constant 0 : i32
    %c0_i32_0 = arith.constant 0 : i32
    %c0_i32_1 = arith.constant 0 : i32
    return %arg0, %c0_i32, %c0_i32_0 : i32, i32, i32
  }
  func.func @transform_1(%arg0: i32) -> (i32, i32, i32) {
    %c0_i32 = arith.constant 0 : i32
    %c0_i32_0 = arith.constant 0 : i32
    %c0_i32_1 = arith.constant 0 : i32
    return %arg0, %c0_i32, %c0_i32_0 : i32, i32, i32
  }
  func.func @transform_2(%arg0: i32) -> (i32, i32) {
    %c0_i32 = arith.constant 0 : i32
    %c0_i32_0 = arith.constant 0 : i32
    %c0_i32_1 = arith.constant 0 : i32
    return %c0_i32, %c0_i32_0 : i32, i32
  }
  func.func @transform_3(%arg0: i32) -> (i32, i32) {
    %c0_i32 = arith.constant 0 : i32
    %c0_i32_0 = arith.constant 0 : i32
    %c0_i32_1 = arith.constant 0 : i32
    return %c0_i32, %c0_i32_0 : i32, i32
  }
  func.func @transform_4(%arg0: i32) -> (i32, i32) {
    %c0_i32 = arith.constant 0 : i32
    %c0_i32_0 = arith.constant 0 : i32
    %c0_i32_1 = arith.constant 0 : i32
    return %c0_i32, %c0_i32_0 : i32, i32
  }
  func.func @transform_5(%arg0: i32) -> (i32, i32) {
    %c0_i32 = arith.constant 0 : i32
    %c0_i32_0 = arith.constant 0 : i32
    %c0_i32_1 = arith.constant 0 : i32
    return %c0_i32, %c0_i32_0 : i32, i32
  }
  func.func @transform_6(%arg0: i32) -> (i32, i32, i32) {
    %c0_i32 = arith.constant 0 : i32
    %c0_i32_0 = arith.constant 0 : i32
    %c0_i32_1 = arith.constant 0 : i32
    return %arg0, %c0_i32, %c0_i32_0 : i32, i32, i32
  }
}

</mosaic_0001>

<llo_original>
// kernel: tpu_custom_call.1
$region0: #{tpu_custom_call.1}
  #allocation0 [shape = 'u32[]', space=smem, size = 0x4, offset = 0x4, fixed_abs, tag = 'smem constant byte address 0x4 - core index']
  #allocation1 [shape = 'u32[72,128]{1,0:T(1,128)}', space=vmem, size = 0x9000, scoped, tag = 'internal scratch']
  %s0 = inlined_call_operand.vmem [shape: s32[2,8,1], index: 0, kind: input, shape index: {}]
  %s1 = inlined_call_operand.vmem [shape: s32[2,8,1], index: 1, kind: input, shape index: {}]
  %s2 = inlined_call_operand.vmem [shape: f32[24,32], index: 2, kind: input, shape index: {}]
  %s3 = inlined_call_operand.vmem [shape: f32[3,32], index: 3, kind: input, shape index: {}]
  %s4 = inlined_call_operand.vmem [shape: f32[8,32], index: 4, kind: input, shape index: {}]
  %s5 = inlined_call_operand.hbm [shape: f32[8,32], index: 5, kind: input, shape index: {}]
  %s6 = inlined_call_operand.hbm [shape: f32[2,8,32], index: 6, kind: output, shape index: {}]
  %s7 = sld [smem:[#allocation0]]
  $region61: #{tpu_custom_call.1} parent=0
    _
  %s9 = ssub.s32 1, %s7
  %s10 = scalar_select 0, %s9, %s7
  $region1: #{tpu_custom_call.1} parent=0
    #allocation2 [shape = 'u8[4096]{0}', space=vmem, size = 0x1000, scoped, tag = 'input window, operand 5, single buffered']
    #allocation3 [shape = 's32[2]{0}', space=sflag, size = 0x8, scoped, tag = 'scoped memory for tpu_custom_call.1']
    #allocation4 [shape = 's32[2]{0}', space=sflag, size = 0x8, scoped, tag = 'scoped memory for tpu_custom_call.1']
    #allocation5 [shape = 'u8[8192]{0}', space=vmem, size = 0x2000, scoped, tag = 'output window, operand 0']
    %11 = vsyncpa [#allocation3], 0
    %12 = vsyncpa [#allocation4], 0
    %s13 = scalar_lea.sflag [#allocation4], 1
    %14 = vsyncpa %s13, 0
    loop: start=0, step=1, limit=4
    $region2: #{tpu_custom_call.1} parent=1 // loop_pre_header
      _
    $region3: #{tpu_custom_call.1} parent=1 // loop_header
      %s16 = sphi 0, %s20
      %p17 = scmp.ge.s32.totalorder %s16, 4
      %s26 = sphi 0, %s28
      %s29 = sphi 0, %s26
      %s30 = sphi 0, %s29
      %s46 = sphi 0, %s30
      %s52 = sphi 0, %s54
      %s55 = sphi 0, %s52
      %s56 = sphi 0, %s55
      %s72 = sphi 0, %s56
      %s76 = sphi 0, %s76
      %s78 = sphi 0, %s76
      %s79 = sphi 0, %s78
      %s93 = sphi 0, %s79
      %s97 = sphi 0, %s97
      %s99 = sphi 0, %s97
      %s100 = sphi 0, %s99
      %s114 = sphi 0, %s100
      %s118 = sphi 0, %s118
      %s120 = sphi 0, %s118
      %s121 = sphi 0, %s120
      %s135 = sphi 0, %s121
      %s139 = sphi 0, %s139
      %s141 = sphi 0, %s139
      %s142 = sphi 0, %s141
      %s156 = sphi 0, %s142
      %s162 = sphi 0, %s164
      %s165 = sphi 0, %s162
      %s166 = sphi 0, %s165
      %s182 = sphi 0, %s166
    $region4: #{tpu_custom_call.1} parent=1 // loop_header_branch
      %19 = sbr.rel (%p17) target = $region8
    $region5: #{tpu_custom_call.1} parent=1 // loop_body
      %s21 = ssub.s32 %s16, 1
      %s22 = ssub.s32 %s16, 2
      %s23 = sadd.s32 %s16, 1
      %s24 = ssub.s32 %s16, %s23
      %p25 = scmp.eq.s32.totalorder %s24, 0
      %s27 = sadd.s32 %s26, 1
      %s28 = scalar_select %p25, %s26, %s27
      %p31 = pneg %p25
      %p32 = scmp.eq.s32.totalorder %s16, 1
      %p33 = por %p31, %p32
      %p34 = scmp.ne.s32.totalorder %s26, %s29
      %p35 = scmp.eq.s32.totalorder %s16, 0
      %p36 = por %p34, %p35
      %p37 = scmp.ne.s32.totalorder %s26, %s29
      %p38 = scmp.eq.s32.totalorder %s21, 1
      %p39 = por %p37, %p38
      %p40 = scmp.ne.s32.totalorder %s29, %s30
      %p41 = scmp.eq.s32.totalorder %s21, 0
      %p42 = por %p40, %p41
      %p43 = scmp.ne.s32.totalorder %s29, %s30
      %p44 = scmp.eq.s32.totalorder %s22, 1
      %p45 = por %p43, %p44
      %p47 = scmp.ne.s32.totalorder %s30, %s46
      %p48 = scmp.eq.s32.totalorder %s22, 0
      %p49 = por %p47, %p48
      %s50 = ssub.s32 %s16, %s23
      %p51 = scmp.eq.s32.totalorder %s50, 0
      %s53 = sadd.s32 %s52, 1
      %s54 = scalar_select %p51, %s52, %s53
      %p57 = pneg %p51
      %p58 = scmp.eq.s32.totalorder %s16, 1
      %p59 = por %p57, %p58
      %p60 = scmp.ne.s32.totalorder %s52, %s55
      %p61 = scmp.eq.s32.totalorder %s16, 0
      %p62 = por %p60, %p61
      %p63 = scmp.ne.s32.totalorder %s52, %s55
      %p64 = scmp.eq.s32.totalorder %s21, 1
      %p65 = por %p63, %p64
      %p66 = scmp.ne.s32.totalorder %s55, %s56
      %p67 = scmp.eq.s32.totalorder %s21, 0
      %p68 = por %p66, %p67
      %p69 = scmp.ne.s32.totalorder %s55, %s56
      %p70 = scmp.eq.s32.totalorder %s22, 1
      %p71 = por %p69, %p70
      %p73 = scmp.ne.s32.totalorder %s56, %s72
      %p74 = scmp.eq.s32.totalorder %s22, 0
      %p75 = por %p73, %p74
      %s77 = sadd.s32 %s76, 1
      %p80 = scmp.eq.s32.totalorder %s16, 1
      %p81 = scmp.ne.s32.totalorder %s76, %s78
      %p82 = scmp.eq.s32.totalorder %s16, 0
      %p83 = por %p81, %p82
      %p84 = scmp.ne.s32.totalorder %s76, %s78
      %p85 = scmp.eq.s32.totalorder %s21, 1
      %p86 = por %p84, %p85
      %p87 = scmp.ne.s32.totalorder %s78, %s79
      %p88 = scmp.eq.s32.totalorder %s21, 0
      %p89 = por %p87, %p88
      %p90 = scmp.ne.s32.totalorder %s78, %s79
      %p91 = scmp.eq.s32.totalorder %s22, 1
      %p92 = por %p90, %p91
      %p94 = scmp.ne.s32.totalorder %s79, %s93
      %p95 = scmp.eq.s32.totalorder %s22, 0
      %p96 = por %p94, %p95
      %s98 = sadd.s32 %s97, 1
      %p101 = scmp.eq.s32.totalorder %s16, 1
      %p102 = scmp.ne.s32.totalorder %s97, %s99
      %p103 = scmp.eq.s32.totalorder %s16, 0
      %p104 = por %p102, %p103
      %p105 = scmp.ne.s32.totalorder %s97, %s99
      %p106 = scmp.eq.s32.totalorder %s21, 1
      %p107 = por %p105, %p106
      %p108 = scmp.ne.s32.totalorder %s99, %s100
      %p109 = scmp.eq.s32.totalorder %s21, 0
      %p110 = por %p108, %p109
      %p111 = scmp.ne.s32.totalorder %s99, %s100
      %p112 = scmp.eq.s32.totalorder %s22, 1
      %p113 = por %p111, %p112
      %p115 = scmp.ne.s32.totalorder %s100, %s114
      %p116 = scmp.eq.s32.totalorder %s22, 0
      %p117 = por %p115, %p116
      %s119 = sadd.s32 %s118, 1
      %p122 = scmp.eq.s32.totalorder %s16, 1
      %p123 = scmp.ne.s32.totalorder %s118, %s120
      %p124 = scmp.eq.s32.totalorder %s16, 0
      %p125 = por %p123, %p124
      %p126 = scmp.ne.s32.totalorder %s118, %s120
      %p127 = scmp.eq.s32.totalorder %s21, 1
      %p128 = por %p126, %p127
      %p129 = scmp.ne.s32.totalorder %s120, %s121
      %p130 = scmp.eq.s32.totalorder %s21, 0
      %p131 = por %p129, %p130
      %p132 = scmp.ne.s32.totalorder %s120, %s121
      %p133 = scmp.eq.s32.totalorder %s22, 1
      %p134 = por %p132, %p133
      %p136 = scmp.ne.s32.totalorder %s121, %s135
      %p137 = scmp.eq.s32.totalorder %s22, 0
      %p138 = por %p136, %p137
      %s140 = sadd.s32 %s139, 1
      %p143 = scmp.eq.s32.totalorder %s16, 1
      %p144 = scmp.ne.s32.totalorder %s139, %s141
      %p145 = scmp.eq.s32.totalorder %s16, 0
      %p146 = por %p144, %p145
      %p147 = scmp.ne.s32.totalorder %s139, %s141
      %p148 = scmp.eq.s32.totalorder %s21, 1
      %p149 = por %p147, %p148
      %p150 = scmp.ne.s32.totalorder %s141, %s142
      %p151 = scmp.eq.s32.totalorder %s21, 0
      %p152 = por %p150, %p151
      %p153 = scmp.ne.s32.totalorder %s141, %s142
      %p154 = scmp.eq.s32.totalorder %s22, 1
      %p155 = por %p153, %p154
      %p157 = scmp.ne.s32.totalorder %s142, %s156
      %p158 = scmp.eq.s32.totalorder %s22, 0
      %p159 = por %p157, %p158
      %s160 = ssub.s32 %s16, %s23
      %p161 = scmp.eq.s32.totalorder %s160, 0
      %s163 = sadd.s32 %s162, 1
      %s164 = scalar_select %p161, %s162, %s163
      %p167 = pneg %p161
      %p168 = scmp.eq.s32.totalorder %s16, 1
      %p169 = por %p167, %p168
      %p170 = scmp.ne.s32.totalorder %s162, %s165
      %p171 = scmp.eq.s32.totalorder %s16, 0
      %p172 = por %p170, %p171
      %p173 = scmp.ne.s32.totalorder %s162, %s165
      %p174 = scmp.eq.s32.totalorder %s21, 1
      %p175 = por %p173, %p174
      %p176 = scmp.ne.s32.totalorder %s165, %s166
      %p177 = scmp.eq.s32.totalorder %s21, 0
      %p178 = por %p176, %p177
      %p179 = scmp.ne.s32.totalorder %s165, %s166
      %p180 = scmp.eq.s32.totalorder %s22, 1
      %p181 = por %p179, %p180
      %p183 = scmp.ne.s32.totalorder %s166, %s182
      %p184 = scmp.eq.s32.totalorder %s22, 0
      %p185 = por %p183, %p184
      %p186 = scmp.le.s32.totalorder 1, %s16
      %p187 = scmp.lt.s32.totalorder %s16, 3
      %p188 = pnand %p186, %p187
      %p189 = pneg %p188
      // Predicated region
      $region9: #{tpu_custom_call.1} parent=5 // pred_check
        _
      $region10: #{tpu_custom_call.1} parent=5 // pred_check_branch
        %191 = sbr.rel (%p188) target = $region12
      $region11: #{tpu_custom_call.1} parent=5 // pred_region
        %s192 = ssub.s32 %s16, 1
        // Predicated region
        $region13: #{tpu_custom_call.1} parent=11 // pred_check
          %p193 = pneg %p89
        $region14: #{tpu_custom_call.1} parent=11 // pred_check_branch
          %195 = sbr.rel (%p193) target = $region16
        $region15: #{tpu_custom_call.1} parent=11 // pred_region
          _
        $region16: #{tpu_custom_call.1} parent=11 // pred_fallthru
          _
        // Predicated region
        $region17: #{tpu_custom_call.1} parent=11 // pred_check
          %p196 = pneg %p110
        $region18: #{tpu_custom_call.1} parent=11 // pred_check_branch
          %198 = sbr.rel (%p196) target = $region20
        $region19: #{tpu_custom_call.1} parent=11 // pred_region
          _
        $region20: #{tpu_custom_call.1} parent=11 // pred_fallthru
          _
        // Predicated region
        $region21: #{tpu_custom_call.1} parent=11 // pred_check
          %p199 = pneg %p131
        $region22: #{tpu_custom_call.1} parent=11 // pred_check_branch
          %201 = sbr.rel (%p199) target = $region24
        $region23: #{tpu_custom_call.1} parent=11 // pred_region
          _
        $region24: #{tpu_custom_call.1} parent=11 // pred_fallthru
          _
        // Predicated region
        $region25: #{tpu_custom_call.1} parent=11 // pred_check
          %p202 = pneg %p152
        $region26: #{tpu_custom_call.1} parent=11 // pred_check_branch
          %204 = sbr.rel (%p202) target = $region28
        $region27: #{tpu_custom_call.1} parent=11 // pred_region
          %206 = vsyncadd [#allocation3], 0
          %s208 = sshll.u32 %s5, 4
          %s209 = int_to_ptr.hbm [resolvable:$true] %s208
          %s210 = sshll.u32 [#allocation2], 4
          %s211 = int_to_ptr.vmem [resolvable:$true] %s210
          %213 = dma.hbm_to_vmem [thread:$0]  %s209, 128, %s211, [#allocation3]
        $region28: #{tpu_custom_call.1} parent=11 // pred_fallthru
          _
      $region12: #{tpu_custom_call.1} parent=5 // pred_fallthru
        _
      %p214 = scmp.lt.s32.totalorder %s16, 2
      // Predicated region
      $region29: #{tpu_custom_call.1} parent=5 // pred_check
        %p215 = pneg %p214
      $region30: #{tpu_custom_call.1} parent=5 // pred_check_branch
        %217 = sbr.rel (%p215) target = $region32
      $region31: #{tpu_custom_call.1} parent=5 // pred_region
        // Predicated region
        $region33: #{tpu_custom_call.1} parent=31 // pred_check
          %p218 = pneg %p36
        $region34: #{tpu_custom_call.1} parent=31 // pred_check_branch
          %220 = sbr.rel (%p218) target = $region36
        $region35: #{tpu_custom_call.1} parent=31 // pred_region
          %p221 = scmp.lt.s32.totalorder %s16, 1
          %s222 = scalar_select %p221, %s16, 1
          %s223 = smul.addr %s222, 8
          %s224 = scalar_lea.vmem %s0, %s223
        $region36: #{tpu_custom_call.1} parent=31 // pred_fallthru
          _
        // Predicated region
        $region37: #{tpu_custom_call.1} parent=31 // pred_check
          %p225 = pneg %p62
        $region38: #{tpu_custom_call.1} parent=31 // pred_check_branch
          %227 = sbr.rel (%p225) target = $region40
        $region39: #{tpu_custom_call.1} parent=31 // pred_region
          %p228 = scmp.lt.s32.totalorder %s16, 1
          %s229 = scalar_select %p228, %s16, 1
          %s230 = smul.addr %s229, 8
          %s231 = scalar_lea.vmem %s1, %s230
        $region40: #{tpu_custom_call.1} parent=31 // pred_fallthru
          _
      $region32: #{tpu_custom_call.1} parent=5 // pred_fallthru
        _
      %p232 = scmp.le.s32.totalorder 1, %s16
      %p233 = scmp.lt.s32.totalorder %s16, 3
      %p234 = pnand %p232, %p233
      %p235 = pneg %p234
      // Predicated region
      $region41: #{tpu_custom_call.1} parent=5 // pred_check
        _
      $region42: #{tpu_custom_call.1} parent=5 // pred_check_branch
        %237 = sbr.rel (%p234) target = $region44
      $region43: #{tpu_custom_call.1} parent=5 // pred_region
        %s238 = ssub.s32 %s16, 1
        // Predicated region
        $region45: #{tpu_custom_call.1} parent=43 // pred_check
          %p239 = pneg %p152
        $region46: #{tpu_custom_call.1} parent=43 // pred_check_branch
          %241 = sbr.rel (%p239) target = $region48
        $region47: #{tpu_custom_call.1} parent=43 // pred_region
          %243 = dma.done [#allocation3], 128
        $region48: #{tpu_custom_call.1} parent=43 // pred_fallthru
          _
        %p244 = scmp.lt.s32.totalorder %s21, 1
        %s245 = scalar_select %p244, %s21, 1
        %s246 = smul.addr %s245, 8
        %s247 = scalar_lea.vmem %s0, %s246
        %p248 = pneg %p42
        %p249 = pneg %p39
        %p250 = scmp.lt.s32.totalorder %s21, 1
        %s251 = scalar_select %p250, %s21, 1
        %s252 = smul.addr %s251, 8
        %s253 = scalar_lea.vmem %s1, %s252
        %p254 = pneg %p68
        %p255 = pneg %p65
        %p256 = pneg %p89
        %p257 = pneg %p86
        %p258 = pneg %p110
        %p259 = pneg %p107
        %p260 = pneg %p131
        %p261 = pneg %p128
        %p262 = pneg %p152
        %p263 = pneg %p149
        %p264 = pneg %p178
        %p265 = pneg %p175
        %s266 = sand.u32 %s165, 1
        %s267 = scalar_lea.sflag [#allocation4], %s266
        %s268 = sand.u32 %s165, 1
        %s269 = smul.addr %s268, 8
        %s270 = scalar_lea.vmem [#allocation5], %s269
        %p271 = scmp.lt.s32.totalorder %s21, 1
        %s272 = scalar_select %p271, %s21, 1
        %s273 = smul.addr %s272, 8
        %s274 = scalar_lea.vmem %s0, %s273
        %p275 = scmp.lt.s32.totalorder %s21, 1
        %s276 = scalar_select %p275, %s21, 1
        %s277 = smul.addr %s276, 8
        %s278 = scalar_lea.vmem %s1, %s277
        %v279 = vld [vmem:[%s274] sm:$0xff]
        %v280 = vld [vmem:[%s278] sm:$0xff]
        %v281 = vlaneseq
        %v282 = vand.u32 %v281, 127
        %283 = vset.pattern.permute.xlu0 0
        %284 = vperm.xlu0 %283, %v279
        %v285 = vpop.permute.xlu0 %284
        %vm286 = vcmp.eq.s32.totalorder %v282, %v285
        %v287 = vsel %vm286, 1, 0
        %v288 = vcvt.s32.f32 %v287
        %289 = vset.pattern.permute.xlu0 0
        %290 = vperm.xlu0 %289, %v280
        %v291 = vpop.permute.xlu0 %290
        %vm292 = vcmp.eq.s32.totalorder %v282, %v291
        %v293 = vsel %vm292, 1, 0
        %v294 = vcvt.s32.f32 %v293
        %v295 = vld [vmem:[%s2] sm:$0xff]
        %v296 = vld [vmem:[%s2 + $0x8] sm:$0xff]
        %v297 = vld [vmem:[%s2 + $0x10] sm:$0xff]
        %v298 = vld [vmem:[%s3] sm:$0x7]
        %vm299 = vcmask 23552
        %v301 = vsel %vm299, %v294, 0
        %vm303 = vcmask 1042432
        %v305 = vsel %vm303, %v298, 0
        %307 = vmatpush.msra.mxu0 0.0
        %308 = vmatpush.msra.mxu0 0.0
        %309 = vmatpush.msra.mxu0 0.0
        %310 = vmatpush.msra.mxu0 0.0
        %311 = vmatpush.msra.mxu0 0.0
        %312 = vmatpush.msra.mxu0 0.0
        %313 = vmatpush.msra.mxu0 0.0
        %314 = vmatpush.msra.mxu0 0.0
        %315 = vmatpush.msra.mxu0 0.0
        %316 = vmatpush.msra.mxu0 0.0
        %317 = vmatpush.msra.mxu0 0.0
        %318 = vmatpush.msra.mxu0 0.0
        %319 = vmatpush.msra.mxu0 0.0
        %320 = vmatpush.msra.mxu0 0.0
        %321 = vmatpush.msra.mxu0 0.0
        %322 = vmatpush.msra.mxu0 %v305
        %323 = vmatmul.f32.gmra.mxu0 %v301
        %v324 = vpop.f32.mrf.mxu0
        %v325 = vadd.f32 0.0, %v324
        %326 = vdwg.mxu0
        %vm327 = vcmask 195584
        %v329 = vsel %vm327, %v288, 0
        %331 = vmatpush.msra.mxu0 0.0
        %332 = vmatpush.msra.mxu0 0.0
        %333 = vmatpush.msra.mxu0 0.0
        %334 = vmatpush.msra.mxu0 0.0
        %335 = vmatpush.msra.mxu0 0.0
        %336 = vmatpush.msra.mxu0 0.0
        %337 = vmatpush.msra.mxu0 0.0
        %338 = vmatpush.msra.mxu0 0.0
        %339 = vmatpush.msra.mxu0 0.0
        %340 = vmatpush.msra.mxu0 0.0
        %341 = vmatpush.msra.mxu0 0.0
        %342 = vmatpush.msra.mxu0 0.0
        %343 = vmatpush.msra.mxu0 0.0
        %344 = vmatpush.msra.mxu0 %v297
        %345 = vmatpush.msra.mxu0 %v296
        %346 = vmatpush.msra.mxu0 %v295
        %347 = vmatmul.f32.gmra.mxu0 %v329
        %v348 = vpop.f32.mrf.mxu0
        %v349 = vadd.f32 %v325, %v348
        %350 = vdwg.mxu0
        %vm351 = vcmask 261120
        %v352 = vsel %vm351, %v349, 0.0
        %353 = vadd.xlane.f32.xlu0 %v352
        %v354 = vpop.xlane.xlu0 %353
        %v355 = vrot.slane %v354, 4
        %v356 = vadd.f32 %v354, %v355
        %v357 = vrot.slane %v356, 2
        %v358 = vadd.f32 %v356, %v357
        %v359 = vrot.slane %v358, 1
        %v360 = vadd.f32 %v358, %v359
        %s361 = vtos %v360
        %v362 = vrcp.pop 256.0
        %v363 = vmul.f32 256.0, %v362
        %v364 = vsub.f32 1.0, %v363
        %v365 = vmul.f32 %v362, %v364
        %v366 = vadd.f32 %v362, %v365
        %vm367 = vweird.f32 %v362
        %v368 = vsel %vm367, %v362, %v366
        %s369 = vtos %v368
        %s370 = smul.f32 %s361, %s369
        %v371 = vstv %s370
        %v372 = vsub.f32 %v349, %v371
        %v373 = vmul.f32 %v372, %v372
        %v374 = vsel %vm351, %v373, 0.0
        %375 = vadd.xlane.f32.xlu0 %v374
        %v376 = vpop.xlane.xlu0 %375
        %v377 = vrot.slane %v376, 4
        %v378 = vadd.f32 %v376, %v377
        %v379 = vrot.slane %v378, 2
        %v380 = vadd.f32 %v378, %v379
        %v381 = vrot.slane %v380, 1
        %v382 = vadd.f32 %v380, %v381
        %s383 = vtos %v382
        %v384 = vrcp.pop 256.0
        %v385 = vmul.f32 256.0, %v384
        %v386 = vsub.f32 1.0, %v385
        %v387 = vmul.f32 %v384, %v386
        %v388 = vadd.f32 %v384, %v387
        %vm389 = vweird.f32 %v384
        %v390 = vsel %vm389, %v384, %v388
        %s391 = vtos %v390
        %s392 = smul.f32 %s383, %s391
        %s393 = sadd.f32 %s392, 1e-05
        %v394 = vstv %s393
        %v395 = vrsqrt.pop %v394
        %v396 = vmul.f32 %v395, %v394
        %v397 = vmul.f32 %v396, %v395
        %v398 = vmul.f32 0.5, %v397
        %v399 = vsub.f32 1.5, %v398
        %v400 = vmul.f32 %v395, %v399
        %vm401 = vweird.f32 %v394
        %vm402 = vweird.f32 %v395
        %vm403 = vmor %vm401, %vm402
        %v404 = vsel %vm403, %v395, %v400
        %s405 = vtos %v404
        %v406 = vstv %s405
        %v407 = vmul.f32 %v372, %v406
        %v408 = vld [vmem:[%s4] sm:$0xff]
        %v409 = vmul.f32 %v407, %v408
        %v410 = vld [vmem:[#allocation2] sm:$0xff]
        %v411 = vadd.f32 %v409, %v410
        %412 = vst.msk [vmem:[%s270] sm:$0xff] %vm351, %v411
        %s413 = sand.u32 %s165, 1
        %s414 = scalar_lea.sflag [#allocation4], %s413
        %s415 = sand.u32 %s165, 1
        %s416 = smul.addr %s415, 8
        %s417 = scalar_lea.vmem [#allocation5], %s416
        // Predicated region
        $region49: #{tpu_custom_call.1} parent=43 // pred_check
          %p418 = pneg %p175
        $region50: #{tpu_custom_call.1} parent=43 // pred_check_branch
          %420 = sbr.rel (%p418) target = $region52
        $region51: #{tpu_custom_call.1} parent=43 // pred_region
          %422 = vsyncadd %s414, 0
          %s423 = smul.addr %s21, 8
          %s424 = scalar_lea.hbm %s6, %s423
          %s426 = sshll.u32 %s417, 4
          %s427 = int_to_ptr.vmem [resolvable:$true] %s426
          %s428 = sshll.u32 %s424, 4
          %s429 = int_to_ptr.hbm [resolvable:$true] %s428
          %431 = dma.vmem_to_hbm [thread:$0]  %s427, 128, %s429, %s414
        $region52: #{tpu_custom_call.1} parent=43 // pred_fallthru
          _
      $region44: #{tpu_custom_call.1} parent=5 // pred_fallthru
        _
      %p432 = scmp.le.s32.totalorder 2, %s16
      // Predicated region
      $region53: #{tpu_custom_call.1} parent=5 // pred_check
        %p433 = pneg %p432
      $region54: #{tpu_custom_call.1} parent=5 // pred_check_branch
        %435 = sbr.rel (%p433) target = $region56
      $region55: #{tpu_custom_call.1} parent=5 // pred_region
        %s436 = ssub.s32 %s16, 2
        // Predicated region
        $region57: #{tpu_custom_call.1} parent=55 // pred_check
          %p437 = pneg %p181
        $region58: #{tpu_custom_call.1} parent=55 // pred_check_branch
          %439 = sbr.rel (%p437) target = $region60
        $region59: #{tpu_custom_call.1} parent=55 // pred_region
          %s440 = sand.u32 %s166, 1
          %s441 = scalar_lea.sflag [#allocation4], %s440
          %s442 = sand.u32 %s166, 1
          %s443 = smul.addr %s442, 8
          %s444 = scalar_lea.vmem [#allocation5], %s443
          %446 = dma.done %s441, 128
        $region60: #{tpu_custom_call.1} parent=55 // pred_fallthru
          _
      $region56: #{tpu_custom_call.1} parent=5 // pred_fallthru
        _
    $region6: #{tpu_custom_call.1} parent=1 // loop_footer
      %s20 = sadd.s32 1, %s16
    $region7: #{tpu_custom_call.1} parent=1 // loop_footer_branch
      %15 = sbr.rel target = $region3
    $region8: #{tpu_custom_call.1} parent=1 // loop_exit
      _
    %447 = vsyncpa [#allocation3], 1
    %s448 = scalar_lea.sflag [#allocation3], 1
    %449 = vsyncpa %s448, 1
    %450 = vsyncpa [#allocation4], 1
    %s451 = scalar_lea.sflag [#allocation4], 1
    %452 = vsyncpa %s451, 1

</llo_original>
